<compile_context>
chip_gen: v6e
topology: v6e:2x2x1
jax: 0.10.0
libtpu: 0.0.40
codegen_flags: <defaults>
</compile_context>

<pallas_src>
import jax
import jax.numpy as jnp
from jax.experimental import pallas as pl
from jax.experimental.pallas import tpu as pltpu

_NEG = -1e30  # large finite negative: exp underflows to exactly 0, max-subtract stays robust


# ---------------------------------------------------------------------------
# Kernel: one (Bt, n, m) block of batches per grid step, fused block-diagonal Gram.
# ---------------------------------------------------------------------------
def temporal_attention_kernel(x_ref, o_ref):
    bt, n, m = x_ref.shape
    r = bt * n

    # Keep the operand dtype for the MXU (bf16 stays bf16); accumulate in f32.
    x = x_ref[...].reshape(r, m)                                   # (r, m), m on lanes

    # One full-width Gram matmul over all fused batches; contraction over the
    # lane dim of both operands -> no explicit transpose materialized.
    s = jnp.einsum('rd,cd->rc', x, x,
                   preferred_element_type=jnp.float32)             # (r, r)

    # Mask entries that mix different batches so the softmax is exactly the
    # per-batch softmax (off-diagonal blocks exp to 0).
    if bt > 1:
        rb = jax.lax.broadcasted_iota(jnp.int32, (r, r), 0) // n
        cb = jax.lax.broadcasted_iota(jnp.int32, (r, r), 1) // n
        s = jnp.where(rb == cb, s, _NEG)

    # torch softmax(dim=1) on (B, n, n) == softmax over the row axis of each block.
    mx = jnp.max(s, axis=0, keepdims=True)                         # (1, r)
    e = jnp.exp(s - mx)
    inv = pl.reciprocal(jnp.sum(e, axis=0, keepdims=True), approx=False)
    a = (e * inv).astype(x.dtype)                                  # back to MXU dtype

    # Single fused (r, r) @ (r, m) matmul; masked entries are exactly 0 so each
    # output row only sees its own batch.
    y = jnp.dot(a, x, preferred_element_type=jnp.float32)          # (r, m), lane-dense
    o_ref[...] = y.reshape(bt, n, m).astype(o_ref.dtype)


# ---------------------------------------------------------------------------
# Wrapper
# ---------------------------------------------------------------------------
def temporal_attention_fwd(x, *, target_rows=256):
    """x: (B, n, m)  ->  (B, m, n), matching torch's (y @ x).permute(0, 2, 1)."""
    B, n, m = x.shape

    # Choose how many batches to fuse per grid step:
    #   * Bt*n ~ target_rows fills the MXU (128 rows on v5e, 256 on v6e/v7x),
    #   * keep the grid length >= 2 when B > 1 so both v7x TensorCores get work.
    bt = max(1, target_rows // n)
    bt = min(bt, B)
    if B > 1 and pl.cdiv(B, bt) < 2:
        bt = pl.cdiv(B, 2)
    grid_b = pl.cdiv(B, bt)

    # Zero-pad so every block is fully populated: zero rows give a harmless
    # uniform softmax inside their own (masked) block and are sliced away below.
    b_pad = grid_b * bt
    if b_pad != B:
        x = jnp.pad(x, ((0, b_pad - B), (0, 0), (0, 0)))

    itemsize = jnp.dtype(x.dtype).itemsize
    cost = pl.CostEstimate(
        flops=int(grid_b * 4 * (bt * n) ** 2 * m),
        transcendentals=int(grid_b * (bt * n) ** 2),
        bytes_accessed=int(2 * b_pad * n * m * itemsize),
    )

    out_nm = pl.pallas_call(
        temporal_attention_kernel,
        out_shape=jax.ShapeDtypeStruct((b_pad, n, m), x.dtype),
        grid=(grid_b,),
        in_specs=[pl.BlockSpec((bt, n, m), lambda b: (b, 0, 0))],
        out_specs=pl.BlockSpec((bt, n, m), lambda b: (b, 0, 0)),
        compiler_params=pltpu.CompilerParams(
            dimension_semantics=("parallel",)),
        cost_estimate=cost,
    )(x)

    out_nm = out_nm[:B]
    # The in-kernel store stays lane-dense (m on lanes); the module-mandated
    # permute(0, 2, 1) is left to XLA.
    # TODO(synk): fuse this permute into the downstream consumer's BlockSpec to
    # avoid the extra HBM read+write of the output.
    return jnp.transpose(out_nm, (0, 2, 1))


# ---------------------------------------------------------------------------
# Pure-JAX reference (mirrors the PyTorch module exactly)
# ---------------------------------------------------------------------------
def temporal_attention_ref(x):
    s = jnp.einsum('bnd,bkd->bnk', x, x)        # x @ x.permute(0, 2, 1)
    y = jax.nn.softmax(s, axis=1)               # nn.Softmax(dim=1)
    out = jnp.einsum('bnk,bkd->bnd', y, x)      # y @ x
    return jnp.transpose(out, (0, 2, 1))        # .permute(0, 2, 1)


if __name__ == "__main__":
    key = jax.random.PRNGKey(0)

    # (batch, time, feature) as implied by the module's forward.
    B, n, m = 2, 8, 128
    x = jax.random.normal(key, (B, n, m), jnp.float32)

    out = jax.block_until_ready(temporal_attention_fwd(x))
    assert out.shape == (B, m, n), out.shape
    assert bool(jnp.all(jnp.isfinite(out)))
    ref = temporal_attention_ref(x)
    assert bool(jnp.allclose(out, ref, atol=1e-5, rtol=1e-5)), float(
        jnp.max(jnp.abs(out - ref)))

    # Exercise the fused multi-batch path (B=64 -> Bt=32, grid=2) and the
    # padded / uneven path (B=5 -> Bt=3, grid=2).
    for B2 in (64, 5):
        x2 = jax.random.normal(jax.random.PRNGKey(1), (B2, n, m), jnp.float32)
        out2 = jax.block_until_ready(temporal_attention_fwd(x2))
        ref2 = temporal_attention_ref(x2)
        assert out2.shape == (B2, m, n), out2.shape
        assert bool(jnp.allclose(out2, ref2, atol=1e-5, rtol=1e-5)), float(
            jnp.max(jnp.abs(out2 - ref2)))

    print("KERNEL_OK")
</pallas_src>

<mosaic_0001>
module attributes {stable_mosaic.version = 11 : i64} {
  func.func @temporal_attention_kernel(%arg0: i32, %arg1: memref<1x8x128xf32, #tpu.memory_space<vmem>>, %arg2: memref<1x8x128xf32, #tpu.memory_space<vmem>>) attributes {dimension_semantics = [#tpu.dimension_semantics<parallel>], iteration_bounds = array<i64: 2>, scalar_prefetch = 0 : i64, scratch_operands = 0 : i64, tpu.core_type = #tpu.core_type<tc>, window_params = [{transform_indices = @transform_0, window_bounds = array<i64: 1, 8, 128>}, {transform_indices = @transform_1, window_bounds = array<i64: 1, 8, 128>}]} {
    %c0 = arith.constant 0 : index
    %c0_0 = arith.constant 0 : index
    %c0_1 = arith.constant 0 : index
    %0 = vector.load %arg1[%c0, %c0_0, %c0_1] : memref<1x8x128xf32, #tpu.memory_space<vmem>>, vector<1x8x128xf32>
    %1 = vector.shape_cast %0 : vector<1x8x128xf32> to vector<8x128xf32>
    "tpu.trace_start"() <{level = 10 : i32, message = "rd,cd->rc"}> : () -> ()
    %cst = arith.constant dense<0.000000e+00> : vector<8x8xf32>
    %2 = tpu.matmul %1, %1, %cst {dimension_numbers = #tpu.dot_dimension_numbers<[1], [1], [0], [0], [0, 0, 1, 0], [], []>} : vector<8x128xf32>, vector<8x128xf32>, vector<8x8xf32> -> vector<8x8xf32>
    "tpu.trace_stop"() : () -> ()
    %cst_2 = arith.constant dense<0xFF800000> : vector<8xf32>
    %3 = vector.multi_reduction <maximumf>, %2, %cst_2 [0] : vector<8x8xf32> to vector<8xf32>
    %4 = vector.shape_cast %3 : vector<8xf32> to vector<1x8xf32>
    %5 = vector.broadcast %4 : vector<1x8xf32> to vector<8x8xf32>
    %6 = arith.subf %2, %5 : vector<8x8xf32>
    %7 = math.exp %6 : vector<8x8xf32>
    %cst_3 = arith.constant dense<0.000000e+00> : vector<8xf32>
    %8 = vector.multi_reduction <add>, %7, %cst_3 [0] : vector<8x8xf32> to vector<8xf32>
    %9 = vector.shape_cast %8 : vector<8xf32> to vector<1x8xf32>
    %10 = tpu.reciprocal %9 : vector<1x8xf32> -> vector<1x8xf32>
    %11 = vector.broadcast %10 : vector<1x8xf32> to vector<8x8xf32>
    %12 = arith.mulf %7, %11 : vector<8x8xf32>
    %cst_4 = arith.constant dense<0.000000e+00> : vector<8x128xf32>
    %13 = tpu.matmul %12, %1, %cst_4 {dimension_numbers = #tpu.dot_dimension_numbers<[1], [0], [0], [1], [0, 0, 1, 1], [], []>} : vector<8x8xf32>, vector<8x128xf32>, vector<8x128xf32> -> vector<8x128xf32>
    %14 = vector.shape_cast %13 : vector<8x128xf32> to vector<1x8x128xf32>
    %c0_5 = arith.constant 0 : index
    %c0_6 = arith.constant 0 : index
    %c0_7 = arith.constant 0 : index
    %15 = vector.load %arg2[%c0_5, %c0_6, %c0_7] : memref<1x8x128xf32, #tpu.memory_space<vmem>>, vector<1x8x128xf32>
    tpu.vector_store %arg2[%c0_5, %c0_6, %c0_7], %14 {strides = array<i32>} : memref<1x8x128xf32, #tpu.memory_space<vmem>>, vector<1x8x128xf32>,
    return
  }
  func.func @transform_0(%arg0: i32) -> (i32, i32, i32) {
    %c0_i32 = arith.constant 0 : i32
    %c0_i32_0 = arith.constant 0 : i32
    %c0_i32_1 = arith.constant 0 : i32
    return %arg0, %c0_i32, %c0_i32_0 : i32, i32, i32
  }
  func.func @transform_1(%arg0: i32) -> (i32, i32, i32) {
    %c0_i32 = arith.constant 0 : i32
    %c0_i32_0 = arith.constant 0 : i32
    %c0_i32_1 = arith.constant 0 : i32
    return %arg0, %c0_i32, %c0_i32_0 : i32, i32, i32
  }
}

</mosaic_0001>

<llo_original>
// kernel: tpu_custom_call.1
$region0: #{tpu_custom_call.1}
  #allocation0 [shape = 'u32[]', space=smem, size = 0x4, offset = 0x4, fixed_abs, tag = 'smem constant byte address 0x4 - core index']
  #allocation1 [shape = 'u32[144,128]{1,0:T(1,128)}', space=vmem, size = 0x12000, scoped, tag = 'internal scratch']
  %s0 = inlined_call_operand.hbm [shape: f32[2,8,128], index: 0, kind: input, shape index: {}]
  %s1 = inlined_call_operand.hbm [shape: f32[2,8,128], index: 1, kind: output, shape index: {}]
  %s2 = sld [smem:[#allocation0]]
  $region41: #{tpu_custom_call.1} parent=0
    _
  %s4 = ssub.s32 1, %s2
  %s5 = scalar_select 0, %s4, %s2
  $region1: #{tpu_custom_call.1} parent=0
    #allocation2 [shape = 'u8[8192]{0}', space=vmem, size = 0x2000, scoped, tag = 'input window, operand 0']
    #allocation3 [shape = 's32[2]{0}', space=sflag, size = 0x8, scoped, tag = 'scoped memory for tpu_custom_call.1']
    #allocation4 [shape = 's32[2]{0}', space=sflag, size = 0x8, scoped, tag = 'scoped memory for tpu_custom_call.1']
    #allocation5 [shape = 'u8[8192]{0}', space=vmem, size = 0x2000, scoped, tag = 'output window, operand 0']
    %6 = vsyncpa [#allocation3], 0
    %s7 = scalar_lea.sflag [#allocation3], 1
    %8 = vsyncpa %s7, 0
    %9 = vsyncpa [#allocation4], 0
    %s10 = scalar_lea.sflag [#allocation4], 1
    %11 = vsyncpa %s10, 0
    loop: start=0, step=1, limit=4
    $region2: #{tpu_custom_call.1} parent=1 // loop_pre_header
      _
    $region3: #{tpu_custom_call.1} parent=1 // loop_header
      %s13 = sphi 0, %s17
      %p14 = scmp.ge.s32.totalorder %s13, 4
      %s23 = sphi 0, %s25
      %s26 = sphi 0, %s23
      %s27 = sphi 0, %s26
      %s43 = sphi 0, %s27
      %s49 = sphi 0, %s51
      %s52 = sphi 0, %s49
      %s53 = sphi 0, %s52
      %s69 = sphi 0, %s53
    $region4: #{tpu_custom_call.1} parent=1 // loop_header_branch
      %16 = sbr.rel (%p14) target = $region8
    $region5: #{tpu_custom_call.1} parent=1 // loop_body
      %s18 = ssub.s32 %s13, 1
      %s19 = ssub.s32 %s13, 2
      %s20 = sadd.s32 %s13, 1
      %s21 = ssub.s32 %s13, %s20
      %p22 = scmp.eq.s32.totalorder %s21, 0
      %s24 = sadd.s32 %s23, 1
      %s25 = scalar_select %p22, %s23, %s24
      %p28 = pneg %p22
      %p29 = scmp.eq.s32.totalorder %s13, 1
      %p30 = por %p28, %p29
      %p31 = scmp.ne.s32.totalorder %s23, %s26
      %p32 = scmp.eq.s32.totalorder %s13, 0
      %p33 = por %p31, %p32
      %p34 = scmp.ne.s32.totalorder %s23, %s26
      %p35 = scmp.eq.s32.totalorder %s18, 1
      %p36 = por %p34, %p35
      %p37 = scmp.ne.s32.totalorder %s26, %s27
      %p38 = scmp.eq.s32.totalorder %s18, 0
      %p39 = por %p37, %p38
      %p40 = scmp.ne.s32.totalorder %s26, %s27
      %p41 = scmp.eq.s32.totalorder %s19, 1
      %p42 = por %p40, %p41
      %p44 = scmp.ne.s32.totalorder %s27, %s43
      %p45 = scmp.eq.s32.totalorder %s19, 0
      %p46 = por %p44, %p45
      %s47 = ssub.s32 %s13, %s20
      %p48 = scmp.eq.s32.totalorder %s47, 0
      %s50 = sadd.s32 %s49, 1
      %s51 = scalar_select %p48, %s49, %s50
      %p54 = pneg %p48
      %p55 = scmp.eq.s32.totalorder %s13, 1
      %p56 = por %p54, %p55
      %p57 = scmp.ne.s32.totalorder %s49, %s52
      %p58 = scmp.eq.s32.totalorder %s13, 0
      %p59 = por %p57, %p58
      %p60 = scmp.ne.s32.totalorder %s49, %s52
      %p61 = scmp.eq.s32.totalorder %s18, 1
      %p62 = por %p60, %p61
      %p63 = scmp.ne.s32.totalorder %s52, %s53
      %p64 = scmp.eq.s32.totalorder %s18, 0
      %p65 = por %p63, %p64
      %p66 = scmp.ne.s32.totalorder %s52, %s53
      %p67 = scmp.eq.s32.totalorder %s19, 1
      %p68 = por %p66, %p67
      %p70 = scmp.ne.s32.totalorder %s53, %s69
      %p71 = scmp.eq.s32.totalorder %s19, 0
      %p72 = por %p70, %p71
      %p73 = scmp.le.s32.totalorder 1, %s13
      %p74 = scmp.lt.s32.totalorder %s13, 3
      %p75 = pnand %p73, %p74
      %p76 = pneg %p75
      // Predicated region
      $region9: #{tpu_custom_call.1} parent=5 // pred_check
        _
      $region10: #{tpu_custom_call.1} parent=5 // pred_check_branch
        %78 = sbr.rel (%p75) target = $region12
      $region11: #{tpu_custom_call.1} parent=5 // pred_region
        %s79 = ssub.s32 %s13, 1
      $region12: #{tpu_custom_call.1} parent=5 // pred_fallthru
        _
      %p80 = scmp.lt.s32.totalorder %s13, 2
      // Predicated region
      $region13: #{tpu_custom_call.1} parent=5 // pred_check
        %p81 = pneg %p80
      $region14: #{tpu_custom_call.1} parent=5 // pred_check_branch
        %83 = sbr.rel (%p81) target = $region16
      $region15: #{tpu_custom_call.1} parent=5 // pred_region
        // Predicated region
        $region17: #{tpu_custom_call.1} parent=15 // pred_check
          %p84 = pneg %p33
        $region18: #{tpu_custom_call.1} parent=15 // pred_check_branch
          %86 = sbr.rel (%p84) target = $region20
        $region19: #{tpu_custom_call.1} parent=15 // pred_region
          %s87 = sand.u32 %s23, 1
          %s88 = scalar_lea.sflag [#allocation3], %s87
          %s89 = sand.u32 %s23, 1
          %s90 = smul.addr %s89, 8
          %s91 = scalar_lea.vmem [#allocation2], %s90
          %s93 = ssub.s32 128, 128
          %94 = vsyncadd %s88, %s93
          %s95 = smul.addr %s13, 128
          %s96 = scalar_lea.hbm %s0, %s95
          %s98 = sshll.u32 %s91, 4
          %s99 = int_to_ptr.vmem [resolvable:$true] %s98
          %101 = dma.hbm_to_vmem [thread:$0]  %s96, 128, %s99, %s88
        $region20: #{tpu_custom_call.1} parent=15 // pred_fallthru
          _
      $region16: #{tpu_custom_call.1} parent=5 // pred_fallthru
        _
      %p102 = scmp.le.s32.totalorder 1, %s13
      %p103 = scmp.lt.s32.totalorder %s13, 3
      %p104 = pnand %p102, %p103
      %p105 = pneg %p104
      // Predicated region
      $region21: #{tpu_custom_call.1} parent=5 // pred_check
        _
      $region22: #{tpu_custom_call.1} parent=5 // pred_check_branch
        %107 = sbr.rel (%p104) target = $region24
      $region23: #{tpu_custom_call.1} parent=5 // pred_region
        %s108 = ssub.s32 %s13, 1
        %s109 = sand.u32 %s26, 1
        %s110 = scalar_lea.sflag [#allocation3], %s109
        %s111 = sand.u32 %s26, 1
        %s112 = smul.addr %s111, 8
        %s113 = scalar_lea.vmem [#allocation2], %s112
        // Predicated region
        $region25: #{tpu_custom_call.1} parent=23 // pred_check
          %p114 = pneg %p39
        $region26: #{tpu_custom_call.1} parent=23 // pred_check_branch
          %116 = sbr.rel (%p114) target = $region28
        $region27: #{tpu_custom_call.1} parent=23 // pred_region
          %117 = dma.done %s110, 128
        $region28: #{tpu_custom_call.1} parent=23 // pred_fallthru
          _
        %s118 = sand.u32 %s26, 1
        %s119 = scalar_lea.sflag [#allocation3], %s118
        %s120 = sand.u32 %s26, 1
        %s121 = smul.addr %s120, 8
        %s122 = scalar_lea.vmem [#allocation2], %s121
        %p123 = pneg %p39
        %p124 = pneg %p36
        %p125 = pneg %p65
        %p126 = pneg %p62
        %s127 = sand.u32 %s52, 1
        %s128 = scalar_lea.sflag [#allocation4], %s127
        %s129 = sand.u32 %s52, 1
        %s130 = smul.addr %s129, 8
        %s131 = scalar_lea.vmem [#allocation5], %s130
        %v132 = vld [vmem:[%s113] sm:$0xff]
        %133 = vmatprep.subr.mxu0 0.0
        %134 = vmatpush1.xpose.msra.mxu0 0.0
        %135 = vmatprep.subr.mxu0 0.0
        %136 = vmatpush1.xpose.msra.mxu0 0.0
        %137 = vmatprep.subr.mxu0 0.0
        %138 = vmatpush1.xpose.msra.mxu0 0.0
        %139 = vmatprep.subr.mxu0 0.0
        %140 = vmatpush1.xpose.msra.mxu0 0.0
        %141 = vmatprep.subr.mxu0 0.0
        %142 = vmatpush1.xpose.msra.mxu0 0.0
        %143 = vmatprep.subr.mxu0 0.0
        %144 = vmatpush1.xpose.msra.mxu0 0.0
        %145 = vmatprep.subr.mxu0 0.0
        %146 = vmatpush1.xpose.msra.mxu0 0.0
        %147 = vmatprep.subr.mxu0 0.0
        %148 = vmatpush1.xpose.msra.mxu0 0.0
        %149 = vmatprep.subr.mxu0 0.0
        %150 = vmatpush1.xpose.msra.mxu0 0.0
        %151 = vmatprep.subr.mxu0 0.0
        %152 = vmatpush1.xpose.msra.mxu0 0.0
        %153 = vmatprep.subr.mxu0 0.0
        %154 = vmatpush1.xpose.msra.mxu0 0.0
        %155 = vmatprep.subr.mxu0 0.0
        %156 = vmatpush1.xpose.msra.mxu0 0.0
        %157 = vmatprep.subr.mxu0 0.0
        %158 = vmatpush1.xpose.msra.mxu0 0.0
        %159 = vmatprep.subr.mxu0 0.0
        %160 = vmatpush1.xpose.msra.mxu0 0.0
        %161 = vmatprep.subr.mxu0 0.0
        %162 = vmatpush1.xpose.msra.mxu0 0.0
        %163 = vmatprep.subr.mxu0 0.0
        %164 = vmatpush1.xpose.msra.mxu0 %v132
        %165 = vmatprep.subr.mxu0 0.0
        %166 = vmatpush2.xpose.msra.mxu0 0.0
        %167 = vmatprep.subr.mxu0 0.0
        %168 = vmatpush2.xpose.msra.mxu0 0.0
        %169 = vmatprep.subr.mxu0 0.0
        %170 = vmatpush2.xpose.msra.mxu0 0.0
        %171 = vmatprep.subr.mxu0 0.0
        %172 = vmatpush2.xpose.msra.mxu0 0.0
        %173 = vmatprep.subr.mxu0 0.0
        %174 = vmatpush2.xpose.msra.mxu0 0.0
        %175 = vmatprep.subr.mxu0 0.0
        %176 = vmatpush2.xpose.msra.mxu0 0.0
        %177 = vmatprep.subr.mxu0 0.0
        %178 = vmatpush2.xpose.msra.mxu0 0.0
        %179 = vmatprep.subr.mxu0 0.0
        %180 = vmatpush2.xpose.msra.mxu0 0.0
        %181 = vmatprep.subr.mxu0 0.0
        %182 = vmatpush2.xpose.msra.mxu0 0.0
        %183 = vmatprep.subr.mxu0 0.0
        %184 = vmatpush2.xpose.msra.mxu0 0.0
        %185 = vmatprep.subr.mxu0 0.0
        %186 = vmatpush2.xpose.msra.mxu0 0.0
        %187 = vmatprep.subr.mxu0 0.0
        %188 = vmatpush2.xpose.msra.mxu0 0.0
        %189 = vmatprep.subr.mxu0 0.0
        %190 = vmatpush2.xpose.msra.mxu0 0.0
        %191 = vmatprep.subr.mxu0 0.0
        %192 = vmatpush2.xpose.msra.mxu0 0.0
        %193 = vmatprep.subr.mxu0 0.0
        %194 = vmatpush2.xpose.msra.mxu0 0.0
        %195 = vmatprep.subr.mxu0 0.0
        %196 = vmatpush2.xpose.msra.mxu0 0.0
        %197 = vmatprep.mubr.f32.mxu0 0.0
        %198 = vmatmul.mubr.f32.gmra.mxu0 %v132
        %v199 = vpop.f32.mrf.mxu0
        %v200 = vadd.f32 0.0, %v199
        %v201 = vpop.f32.mrf.mxu0
        %202 = vdwg.mxu0
        %vm203 = vcmask 64512
        %v204 = vsel %vm203, %v200, -inf
        %v205 = vrot.slane %v204, 4
        %v206 = vmax.f32 %v204, %v205
        %v207 = vrot.slane %v206, 2
        %v208 = vmax.f32 %v206, %v207
        %v209 = vrot.slane %v208, 1
        %v210 = vmax.f32 %v208, %v209
        %v211 = vsub.f32 %v200, %v210
        %v212 = vmul.f32 %v211, 1.442695
        %v213 = vpow.pop %v212
        %v214 = vsel %vm203, %v213, 0.0
        %v215 = vrot.slane %v214, 4
        %v216 = vadd.f32 %v214, %v215
        %v217 = vrot.slane %v216, 2
        %v218 = vadd.f32 %v216, %v217
        %v219 = vrot.slane %v218, 1
        %v220 = vadd.f32 %v218, %v219
        %v221 = vrcp.pop %v220
        %v222 = vmul.f32 %v213, %v221
        %v224 = vsel %vm203, %v222, 0
        %226 = vmatprep.subr.mxu0 0.0
        %227 = vmatpush1.msra.mxu0 0.0
        %228 = vmatprep.subr.mxu0 0.0
        %229 = vmatpush1.msra.mxu0 0.0
        %230 = vmatprep.subr.mxu0 0.0
        %231 = vmatpush1.msra.mxu0 0.0
        %232 = vmatprep.subr.mxu0 0.0
        %233 = vmatpush1.msra.mxu0 0.0
        %234 = vmatprep.subr.mxu0 0.0
        %235 = vmatpush1.msra.mxu0 0.0
        %236 = vmatprep.subr.mxu0 0.0
        %237 = vmatpush1.msra.mxu0 0.0
        %238 = vmatprep.subr.mxu0 0.0
        %239 = vmatpush1.msra.mxu0 0.0
        %240 = vmatprep.subr.mxu0 0.0
        %241 = vmatpush1.msra.mxu0 0.0
        %242 = vmatprep.subr.mxu0 0.0
        %243 = vmatpush1.msra.mxu0 0.0
        %244 = vmatprep.subr.mxu0 0.0
        %245 = vmatpush1.msra.mxu0 0.0
        %246 = vmatprep.subr.mxu0 0.0
        %247 = vmatpush1.msra.mxu0 0.0
        %248 = vmatprep.subr.mxu0 0.0
        %249 = vmatpush1.msra.mxu0 0.0
        %250 = vmatprep.subr.mxu0 0.0
        %251 = vmatpush1.msra.mxu0 0.0
        %252 = vmatprep.subr.mxu0 0.0
        %253 = vmatpush1.msra.mxu0 0.0
        %254 = vmatprep.subr.mxu0 0.0
        %255 = vmatpush1.msra.mxu0 0.0
        %256 = vmatprep.subr.mxu0 0.0
        %257 = vmatpush1.msra.mxu0 %v132
        %258 = vmatprep.subr.mxu0 0.0
        %259 = vmatpush2.msra.mxu0 0.0
        %260 = vmatprep.subr.mxu0 0.0
        %261 = vmatpush2.msra.mxu0 0.0
        %262 = vmatprep.subr.mxu0 0.0
        %263 = vmatpush2.msra.mxu0 0.0
        %264 = vmatprep.subr.mxu0 0.0
        %265 = vmatpush2.msra.mxu0 0.0
        %266 = vmatprep.subr.mxu0 0.0
        %267 = vmatpush2.msra.mxu0 0.0
        %268 = vmatprep.subr.mxu0 0.0
        %269 = vmatpush2.msra.mxu0 0.0
        %270 = vmatprep.subr.mxu0 0.0
        %271 = vmatpush2.msra.mxu0 0.0
        %272 = vmatprep.subr.mxu0 0.0
        %273 = vmatpush2.msra.mxu0 0.0
        %274 = vmatprep.subr.mxu0 0.0
        %275 = vmatpush2.msra.mxu0 0.0
        %276 = vmatprep.subr.mxu0 0.0
        %277 = vmatpush2.msra.mxu0 0.0
        %278 = vmatprep.subr.mxu0 0.0
        %279 = vmatpush2.msra.mxu0 0.0
        %280 = vmatprep.subr.mxu0 0.0
        %281 = vmatpush2.msra.mxu0 0.0
        %282 = vmatprep.subr.mxu0 0.0
        %283 = vmatpush2.msra.mxu0 0.0
        %284 = vmatprep.subr.mxu0 0.0
        %285 = vmatpush2.msra.mxu0 0.0
        %286 = vmatprep.subr.mxu0 0.0
        %287 = vmatpush2.msra.mxu0 0.0
        %288 = vmatprep.subr.mxu0 0.0
        %289 = vmatpush2.msra.mxu0 0.0
        %290 = vmatprep.mubr.f32.mxu0 0.0
        %291 = vmatmul.mubr.f32.gmra.mxu0 %v224
        %v292 = vpop.f32.mrf.mxu0
        %v293 = vadd.f32 0.0, %v292
        %v294 = vpop.f32.mrf.mxu0
        %295 = vdwg.mxu0
        %296 = vst [vmem:[%s131] sm:$0xff] %v293
        %s297 = sand.u32 %s52, 1
        %s298 = scalar_lea.sflag [#allocation4], %s297
        %s299 = sand.u32 %s52, 1
        %s300 = smul.addr %s299, 8
        %s301 = scalar_lea.vmem [#allocation5], %s300
        // Predicated region
        $region29: #{tpu_custom_call.1} parent=23 // pred_check
          %p302 = pneg %p62
        $region30: #{tpu_custom_call.1} parent=23 // pred_check_branch
          %304 = sbr.rel (%p302) target = $region32
        $region31: #{tpu_custom_call.1} parent=23 // pred_region
          %s306 = ssub.s32 128, 128
          %307 = vsyncadd %s298, %s306
          %s308 = smul.addr %s18, 128
          %s309 = scalar_lea.hbm %s1, %s308
          %s311 = sshll.u32 %s301, 4
          %s312 = int_to_ptr.vmem [resolvable:$true] %s311
          %314 = dma.vmem_to_hbm [thread:$0]  %s312, 128, %s309, %s298
        $region32: #{tpu_custom_call.1} parent=23 // pred_fallthru
          _
      $region24: #{tpu_custom_call.1} parent=5 // pred_fallthru
        _
      %p315 = scmp.le.s32.totalorder 2, %s13
      // Predicated region
      $region33: #{tpu_custom_call.1} parent=5 // pred_check
        %p316 = pneg %p315
      $region34: #{tpu_custom_call.1} parent=5 // pred_check_branch
        %318 = sbr.rel (%p316) target = $region36
      $region35: #{tpu_custom_call.1} parent=5 // pred_region
        %s319 = ssub.s32 %s13, 2
        // Predicated region
        $region37: #{tpu_custom_call.1} parent=35 // pred_check
          %p320 = pneg %p68
        $region38: #{tpu_custom_call.1} parent=35 // pred_check_branch
          %322 = sbr.rel (%p320) target = $region40
        $region39: #{tpu_custom_call.1} parent=35 // pred_region
          %s323 = sand.u32 %s53, 1
          %s324 = scalar_lea.sflag [#allocation4], %s323
          %s325 = sand.u32 %s53, 1
          %s326 = smul.addr %s325, 8
          %s327 = scalar_lea.vmem [#allocation5], %s326
          %328 = dma.done %s324, 128
        $region40: #{tpu_custom_call.1} parent=35 // pred_fallthru
          _
      $region36: #{tpu_custom_call.1} parent=5 // pred_fallthru
        _
    $region6: #{tpu_custom_call.1} parent=1 // loop_footer
      %s17 = sadd.s32 1, %s13
    $region7: #{tpu_custom_call.1} parent=1 // loop_footer_branch
      %12 = sbr.rel target = $region3
    $region8: #{tpu_custom_call.1} parent=1 // loop_exit
      _
    %329 = vsyncpa [#allocation3], 1
    %s330 = scalar_lea.sflag [#allocation3], 1
    %331 = vsyncpa %s330, 1
    %332 = vsyncpa [#allocation4], 1
    %s333 = scalar_lea.sflag [#allocation4], 1
    %334 = vsyncpa %s333, 1

</llo_original>
